<compile_context>
chip_gen: v6e
topology: v6e:2x2x1
jax: 0.10.0
libtpu: 0.0.40
codegen_flags: <defaults>
</compile_context>

<pallas_src>
import functools

import jax
import jax.numpy as jnp
from jax.experimental import pallas as pl
from jax.experimental.pallas import tpu as pltpu


# ------------------- Fused kernel: Conv2d (matmul) + bias + MaxPool + Dropout(eval) + Leaky ----- #
def _piczak_fused_kernel(p_ref, w_ref, b_ref, mem_ref, spk_ref, mem_out_ref,
                         *, beta, threshold, n_pool):
    """One sample per grid step.

    p_ref   : (1, PE, K, HW)  bf16  im2col patches, grouped by pooling-window offset pe
    w_ref   : (Cout, K)       bf16  conv weight (rows = output channel)
    b_ref   : (Cout, 1)       f32   conv bias
    mem_ref : (1, Cout, HW)   f32   previous LIF membrane (aliased with mem_out_ref in HBM)
    spk_ref / mem_out_ref : (1, Cout, HW) f32
    """
    w = w_ref[...]                                                    # (Cout, K) bf16

    # Conv fused with MaxPool: pooled[c, f] = max_pe  sum_k  w[c, k] * patches[pe, k, f]
    pooled = jnp.dot(w, p_ref[0, 0], preferred_element_type=jnp.float32)       # (Cout, HW) f32
    for pe in range(1, n_pool):
        pooled = jnp.maximum(
            pooled, jnp.dot(w, p_ref[0, pe], preferred_element_type=jnp.float32))
    pooled = pooled + b_ref[...]          # bias after max == max after bias (per-channel const)

    # Dropout(p): eval-mode identity.
    # TODO(synk): training-mode dropout (pltpu.prng_seed / prng_random_bits mask + 1/(1-p) scale).

    # snntorch.Leaky (reset_mechanism="subtract", fire on the new membrane), all f32:
    m_prev = mem_ref[0]                                               # (Cout, HW)
    reset = (m_prev > threshold).astype(jnp.float32)
    m_new = beta * m_prev + pooled - reset * threshold
    spk = (m_new > threshold).astype(jnp.float32)

    spk_ref[0] = spk
    mem_out_ref[0] = m_new


# ------------------------------------------ Wrapper -------------------------------------------- #
def piczak_snn_block(x, mem, params, *, step, max_pool_ksize, max_pool_step,
                     lif_beta, threshold=1.0):
    """x: (N, Cin, H, W) f32 NCHW; mem: (N, Cout, Hp, Wp) f32.
    Returns (spk, mem_new), both (N, Cout, Hp, Wp)."""
    w, b = params["conv_w"], params["conv_b"]
    N, Cin, H, W = x.shape
    Cout, _, kh, kw = w.shape
    sh, sw = step
    pkh, pkw = max_pool_ksize
    psh, psw = max_pool_step

    Ho = (H - kh) // sh + 1
    Wo = (W - kw) // sw + 1
    Hp = (Ho - pkh) // psh + 1
    Wp = (Wo - pkw) // psw + 1
    K = Cin * kh * kw
    PE = pkh * pkw
    HW = Hp * Wp

    # ---- layout glue (XLA): gather conv-input patches directly at pooled resolution, grouped by
    # pooling-window offset pe=(di,dj).  K axis ordered (ci, i, j) to match w.reshape(Cout, K).
    # Done in bf16 so the HBM intermediate is half size and MXU-ready.
    xb = x.astype(jnp.bfloat16)
    rstride, cstride = psh * sh, psw * sw
    pe_groups = []
    for di in range(pkh):
        for dj in range(pkw):
            taps = []
            for i in range(kh):
                for j in range(kw):
                    r0 = di * sh + i
                    c0 = dj * sw + j
                    taps.append(xb[:, :,
                                   r0:r0 + (Hp - 1) * rstride + 1:rstride,
                                   c0:c0 + (Wp - 1) * cstride + 1:cstride])   # (N, Cin, Hp, Wp)
            pe_groups.append(jnp.stack(taps, axis=2))                 # (N, Cin, kh*kw, Hp, Wp)
    patches = jnp.stack(pe_groups, axis=1).reshape(N, PE, K, HW)      # (N, PE, K, HW) bf16

    w_bf16 = w.reshape(Cout, K).astype(jnp.bfloat16)
    b_col = b.reshape(Cout, 1).astype(jnp.float32)
    mem_flat = mem.reshape(N, Cout, HW).astype(jnp.float32)

    kernel = functools.partial(_piczak_fused_kernel, beta=float(lif_beta),
                               threshold=float(threshold), n_pool=PE)
    spk_flat, mem_new_flat = pl.pallas_call(
        kernel,
        out_shape=(jax.ShapeDtypeStruct((N, Cout, HW), jnp.float32),
                   jax.ShapeDtypeStruct((N, Cout, HW), jnp.float32)),
        grid=(N,),
        in_specs=[
            pl.BlockSpec((1, PE, K, HW), lambda n: (n, 0, 0, 0)),
            pl.BlockSpec((Cout, K), lambda n: (0, 0)),
            pl.BlockSpec((Cout, 1), lambda n: (0, 0)),
            pl.BlockSpec((1, Cout, HW), lambda n: (n, 0, 0)),
        ],
        out_specs=(pl.BlockSpec((1, Cout, HW), lambda n: (n, 0, 0)),
                   pl.BlockSpec((1, Cout, HW), lambda n: (n, 0, 0))),
        input_output_aliases={3: 1},                 # LIF membrane updated in place (P8)
        compiler_params=pltpu.CompilerParams(
            dimension_semantics=("parallel",),
            vmem_limit_bytes=32 * 1024 * 1024),
    )(patches, w_bf16, b_col, mem_flat)

    spk = spk_flat.reshape(N, Cout, Hp, Wp)
    mem_new = mem_new_flat.reshape(N, Cout, Hp, Wp)
    return spk, mem_new


if __name__ == "__main__":
    key = jax.random.PRNGKey(0)
    k_x, k_w, k_b = jax.random.split(key, 3)

    # Module hyper-parameters (small, consistent with the PyTorch ctor).
    N, Cin, H, W = 2, 4, 16, 16
    Cout, kh, kw = 8, 3, 3
    step = (1, 1)
    max_pool_ksize = (2, 2)
    max_pool_step = (2, 2)
    lif_beta = 0.9
    threshold = 1.0

    # Deterministic parameter init (Conv2d default-like uniform scaling).
    fan_in = Cin * kh * kw
    bound = 1.0 / (fan_in ** 0.5)
    conv_w = jax.random.uniform(k_w, (Cout, Cin, kh, kw), jnp.float32, -bound, bound)
    conv_b = jax.random.uniform(k_b, (Cout,), jnp.float32, -bound, bound)
    params = {"conv_w": conv_w, "conv_b": conv_b}

    x = jax.random.normal(k_x, (N, Cin, H, W), jnp.float32)

    Ho = (H - kh) // step[0] + 1
    Wo = (W - kw) // step[1] + 1
    Hp = (Ho - max_pool_ksize[0]) // max_pool_step[0] + 1
    Wp = (Wo - max_pool_ksize[1]) // max_pool_step[1] + 1
    mem = jnp.zeros((N, Cout, Hp, Wp), jnp.float32)          # init_leaky() -> zeros

    block = jax.jit(functools.partial(
        piczak_snn_block, step=step, max_pool_ksize=max_pool_ksize,
        max_pool_step=max_pool_step, lif_beta=lif_beta, threshold=threshold))

    # f32 reference for conv+bias+pool (x is held constant across the two recurrent test steps).
    conv_ref = jax.lax.conv_general_dilated(
        x, conv_w, window_strides=step, padding="VALID",
        dimension_numbers=("NCHW", "OIHW", "NCHW")) + conv_b.reshape(1, Cout, 1, 1)
    pool_ref = jax.lax.reduce_window(
        conv_ref, -jnp.inf, jax.lax.max,
        (1, 1) + max_pool_ksize, (1, 1) + max_pool_step, "VALID")

    # The kernel feeds bf16 to the MXU (f32 accumulation), so compare the membrane with a loose
    # tolerance and skip spike comparison within that margin of the threshold.
    tol = 0.1
    for t in range(2):   # two recurrent steps to exercise the in-place membrane update
        spk, mem_new = block(x, mem, params)
        jax.block_until_ready((spk, mem_new))
        assert spk.shape == (N, Cout, Hp, Wp) and mem_new.shape == (N, Cout, Hp, Wp)

        reset_t = (mem > threshold).astype(jnp.float32)          # same f32 state the kernel used
        mem_exp = lif_beta * mem + pool_ref - reset_t * threshold
        spk_exp = (mem_exp > threshold).astype(jnp.float32)

        assert jnp.allclose(mem_new, mem_exp, atol=tol, rtol=tol), f"membrane mismatch @t={t}"
        safe = jnp.abs(mem_exp - threshold) > tol
        assert bool(jnp.all(jnp.where(safe, spk == spk_exp, True))), f"spike mismatch @t={t}"
        mem = mem_new

    print("KERNEL_OK")
</pallas_src>

<mosaic_0001>
module attributes {stable_mosaic.version = 11 : i64} {
  func.func @_piczak_fused_kernel(%arg0: i32, %arg1: memref<1x4x36x49xbf16, #tpu.memory_space<vmem>>, %arg2: memref<8x36xbf16, #tpu.memory_space<vmem>>, %arg3: memref<8x1xf32, #tpu.memory_space<vmem>>, %arg4: memref<1x8x49xf32, #tpu.memory_space<vmem>>, %arg5: memref<1x8x49xf32, #tpu.memory_space<vmem>>, %arg6: memref<1x8x49xf32, #tpu.memory_space<vmem>>) attributes {dimension_semantics = [#tpu.dimension_semantics<parallel>], iteration_bounds = array<i64: 2>, scalar_prefetch = 0 : i64, scratch_operands = 0 : i64, tpu.core_type = #tpu.core_type<tc>, window_params = [{transform_indices = @transform_0, window_bounds = array<i64: 1, 4, 36, 49>}, {pipeline_mode = #tpu.pipeline_mode<synchronous>, transform_indices = @transform_1, window_bounds = array<i64: 8, 36>}, {pipeline_mode = #tpu.pipeline_mode<synchronous>, transform_indices = @transform_2, window_bounds = array<i64: 8, 1>}, {transform_indices = @transform_3, window_bounds = array<i64: 1, 8, 49>}, {transform_indices = @transform_4, window_bounds = array<i64: 1, 8, 49>}, {transform_indices = @transform_5, window_bounds = array<i64: 1, 8, 49>}]} {
    %c0 = arith.constant 0 : index
    %c0_0 = arith.constant 0 : index
    %0 = vector.load %arg2[%c0, %c0_0] : memref<8x36xbf16, #tpu.memory_space<vmem>>, vector<8x36xbf16>
    %c0_1 = arith.constant 0 : index
    %c0_2 = arith.constant 0 : index
    %c0_3 = arith.constant 0 : index
    %c0_4 = arith.constant 0 : index
    %1 = vector.load %arg1[%c0_1, %c0_2, %c0_3, %c0_4] : memref<1x4x36x49xbf16, #tpu.memory_space<vmem>>, vector<1x1x36x49xbf16>
    %2 = vector.shape_cast %1 : vector<1x1x36x49xbf16> to vector<36x49xbf16>
    %cst = arith.constant dense<0.000000e+00> : vector<8x49xf32>
    %3 = tpu.matmul %0, %2, %cst {dimension_numbers = #tpu.dot_dimension_numbers<[1], [0], [0], [1], [0, 0, 1, 1], [], []>} : vector<8x36xbf16>, vector<36x49xbf16>, vector<8x49xf32> -> vector<8x49xf32>
    %c0_5 = arith.constant 0 : index
    %c1 = arith.constant 1 : index
    %c0_6 = arith.constant 0 : index
    %c0_7 = arith.constant 0 : index
    %4 = vector.load %arg1[%c0_5, %c1, %c0_6, %c0_7] : memref<1x4x36x49xbf16, #tpu.memory_space<vmem>>, vector<1x1x36x49xbf16>
    %5 = vector.shape_cast %4 : vector<1x1x36x49xbf16> to vector<36x49xbf16>
    %cst_8 = arith.constant dense<0.000000e+00> : vector<8x49xf32>
    %6 = tpu.matmul %0, %5, %cst_8 {dimension_numbers = #tpu.dot_dimension_numbers<[1], [0], [0], [1], [0, 0, 1, 1], [], []>} : vector<8x36xbf16>, vector<36x49xbf16>, vector<8x49xf32> -> vector<8x49xf32>
    %7 = arith.maximumf %3, %6 : vector<8x49xf32>
    %c0_9 = arith.constant 0 : index
    %c2 = arith.constant 2 : index
    %c0_10 = arith.constant 0 : index
    %c0_11 = arith.constant 0 : index
    %8 = vector.load %arg1[%c0_9, %c2, %c0_10, %c0_11] : memref<1x4x36x49xbf16, #tpu.memory_space<vmem>>, vector<1x1x36x49xbf16>
    %9 = vector.shape_cast %8 : vector<1x1x36x49xbf16> to vector<36x49xbf16>
    %cst_12 = arith.constant dense<0.000000e+00> : vector<8x49xf32>
    %10 = tpu.matmul %0, %9, %cst_12 {dimension_numbers = #tpu.dot_dimension_numbers<[1], [0], [0], [1], [0, 0, 1, 1], [], []>} : vector<8x36xbf16>, vector<36x49xbf16>, vector<8x49xf32> -> vector<8x49xf32>
    %11 = arith.maximumf %7, %10 : vector<8x49xf32>
    %c0_13 = arith.constant 0 : index
    %c3 = arith.constant 3 : index
    %c0_14 = arith.constant 0 : index
    %c0_15 = arith.constant 0 : index
    %12 = vector.load %arg1[%c0_13, %c3, %c0_14, %c0_15] : memref<1x4x36x49xbf16, #tpu.memory_space<vmem>>, vector<1x1x36x49xbf16>
    %13 = vector.shape_cast %12 : vector<1x1x36x49xbf16> to vector<36x49xbf16>
    %cst_16 = arith.constant dense<0.000000e+00> : vector<8x49xf32>
    %14 = tpu.matmul %0, %13, %cst_16 {dimension_numbers = #tpu.dot_dimension_numbers<[1], [0], [0], [1], [0, 0, 1, 1], [], []>} : vector<8x36xbf16>, vector<36x49xbf16>, vector<8x49xf32> -> vector<8x49xf32>
    %15 = arith.maximumf %11, %14 : vector<8x49xf32>
    %c0_17 = arith.constant 0 : index
    %c0_18 = arith.constant 0 : index
    %16 = vector.load %arg3[%c0_17, %c0_18] : memref<8x1xf32, #tpu.memory_space<vmem>>, vector<8x1xf32>
    %17 = vector.broadcast %16 : vector<8x1xf32> to vector<8x49xf32>
    %18 = arith.addf %15, %17 : vector<8x49xf32>
    %c0_19 = arith.constant 0 : index
    %c0_20 = arith.constant 0 : index
    %c0_21 = arith.constant 0 : index
    %19 = vector.load %arg4[%c0_19, %c0_20, %c0_21] : memref<1x8x49xf32, #tpu.memory_space<vmem>>, vector<1x8x49xf32>
    %20 = vector.shape_cast %19 : vector<1x8x49xf32> to vector<8x49xf32>
    %cst_22 = arith.constant 1.000000e+00 : f32
    %21 = vector.broadcast %cst_22 : f32 to vector<8x49xf32>
    %22 = arith.cmpf ogt, %20, %21 : vector<8x49xf32>
    %23 = arith.extui %22 : vector<8x49xi1> to vector<8x49xi32>
    %24 = arith.sitofp %23 : vector<8x49xi32> to vector<8x49xf32>
    %cst_23 = arith.constant 0.899999976 : f32
    %25 = vector.broadcast %cst_23 : f32 to vector<8x49xf32>
    %26 = arith.mulf %25, %20 : vector<8x49xf32>
    %27 = arith.addf %26, %18 : vector<8x49xf32>
    %cst_24 = arith.constant 1.000000e+00 : f32
    %28 = vector.broadcast %cst_24 : f32 to vector<8x49xf32>
    %29 = arith.mulf %24, %28 : vector<8x49xf32>
    %30 = arith.subf %27, %29 : vector<8x49xf32>
    %cst_25 = arith.constant 1.000000e+00 : f32
    %31 = vector.broadcast %cst_25 : f32 to vector<8x49xf32>
    %32 = arith.cmpf ogt, %30, %31 : vector<8x49xf32>
    %33 = arith.extui %32 : vector<8x49xi1> to vector<8x49xi32>
    %34 = arith.sitofp %33 : vector<8x49xi32> to vector<8x49xf32>
    %c0_26 = arith.constant 0 : index
    %c0_27 = arith.constant 0 : index
    %c0_28 = arith.constant 0 : index
    %35 = vector.load %arg5[%c0_26, %c0_27, %c0_28] : memref<1x8x49xf32, #tpu.memory_space<vmem>>, vector<1x8x49xf32>
    %36 = vector.shape_cast %35 : vector<1x8x49xf32> to vector<8x49xf32>
    %37 = vector.shape_cast %34 : vector<8x49xf32> to vector<1x8x49xf32>
    tpu.vector_store %arg5[%c0_26, %c0_27, %c0_28], %37 {strides = array<i32>} : memref<1x8x49xf32, #tpu.memory_space<vmem>>, vector<1x8x49xf32>,
    %c0_29 = arith.constant 0 : index
    %c0_30 = arith.constant 0 : index
    %c0_31 = arith.constant 0 : index
    %38 = vector.load %arg6[%c0_29, %c0_30, %c0_31] : memref<1x8x49xf32, #tpu.memory_space<vmem>>, vector<1x8x49xf32>
    %39 = vector.shape_cast %38 : vector<1x8x49xf32> to vector<8x49xf32>
    %40 = vector.shape_cast %30 : vector<8x49xf32> to vector<1x8x49xf32>
    tpu.vector_store %arg6[%c0_29, %c0_30, %c0_31], %40 {strides = array<i32>} : memref<1x8x49xf32, #tpu.memory_space<vmem>>, vector<1x8x49xf32>,
    return
  }
  func.func @transform_0(%arg0: i32) -> (i32, i32, i32, i32) {
    %c0_i32 = arith.constant 0 : i32
    %c0_i32_0 = arith.constant 0 : i32
    %c0_i32_1 = arith.constant 0 : i32
    %c0_i32_2 = arith.constant 0 : i32
    return %arg0, %c0_i32, %c0_i32_0, %c0_i32_1 : i32, i32, i32, i32
  }
  func.func @transform_1(%arg0: i32) -> (i32, i32) {
    %c0_i32 = arith.constant 0 : i32
    %c0_i32_0 = arith.constant 0 : i32
    %c0_i32_1 = arith.constant 0 : i32
    return %c0_i32, %c0_i32_0 : i32, i32
  }
  func.func @transform_2(%arg0: i32) -> (i32, i32) {
    %c0_i32 = arith.constant 0 : i32
    %c0_i32_0 = arith.constant 0 : i32
    %c0_i32_1 = arith.constant 0 : i32
    return %c0_i32, %c0_i32_0 : i32, i32
  }
  func.func @transform_3(%arg0: i32) -> (i32, i32, i32) {
    %c0_i32 = arith.constant 0 : i32
    %c0_i32_0 = arith.constant 0 : i32
    %c0_i32_1 = arith.constant 0 : i32
    return %arg0, %c0_i32, %c0_i32_0 : i32, i32, i32
  }
  func.func @transform_4(%arg0: i32) -> (i32, i32, i32) {
    %c0_i32 = arith.constant 0 : i32
    %c0_i32_0 = arith.constant 0 : i32
    %c0_i32_1 = arith.constant 0 : i32
    return %arg0, %c0_i32, %c0_i32_0 : i32, i32, i32
  }
  func.func @transform_5(%arg0: i32) -> (i32, i32, i32) {
    %c0_i32 = arith.constant 0 : i32
    %c0_i32_0 = arith.constant 0 : i32
    %c0_i32_1 = arith.constant 0 : i32
    return %arg0, %c0_i32, %c0_i32_0 : i32, i32, i32
  }
}

</mosaic_0001>

<llo_original>
// kernel: piczak_snn_block.1
$region0: #{piczak_snn_block.1}
  #allocation0 [shape = 'u32[]', space=smem, size = 0x4, offset = 0x4, fixed_abs, tag = 'smem constant byte address 0x4 - core index']
  #allocation1 [shape = 'u32[144,128]{1,0:T(1,128)}', space=vmem, size = 0x12000, scoped, tag = 'internal scratch']
  %s0 = inlined_call_operand.vmem [shape: bf16[2,4,36,49], index: 0, kind: input, shape index: {}]
  %s1 = inlined_call_operand.vmem [shape: bf16[8,36], index: 1, kind: input, shape index: {}]
  %s2 = inlined_call_operand.vmem [shape: f32[8,1], index: 2, kind: input, shape index: {}]
  %s3 = inlined_call_operand.vmem [shape: f32[2,8,49], index: 3, kind: input, shape index: {}, may-alias: {3,5}]
  %s4 = inlined_call_operand.vmem [shape: f32[2,8,49], index: 4, kind: output, shape index: {0}]
  %s5 = inlined_call_operand.vmem [shape: f32[2,8,49], index: 5, kind: output, shape index: {1}, may-alias: {3,5}]
  %6 = xla_tuple %s4, %s5
  %s7 = sld [smem:[#allocation0]]
  $region57: #{piczak_snn_block.1} parent=0
    _
  %s9 = ssub.s32 1, %s7
  %s10 = scalar_select 0, %s9, %s7
  loop: start=0, step=1, limit=4
  $region2: #{piczak_snn_block.1} parent=0 // loop_pre_header
    _
  $region3: #{piczak_snn_block.1} parent=0 // loop_header
    %s12 = sphi 0, %s16
    %p13 = scmp.ge.s32.totalorder %s12, 4
    %s22 = sphi 0, %s24
    %s25 = sphi 0, %s22
    %s26 = sphi 0, %s25
    %s42 = sphi 0, %s26
    %s46 = sphi 0, %s46
    %s48 = sphi 0, %s46
    %s49 = sphi 0, %s48
    %s63 = sphi 0, %s49
    %s67 = sphi 0, %s67
    %s69 = sphi 0, %s67
    %s70 = sphi 0, %s69
    %s84 = sphi 0, %s70
    %s90 = sphi 0, %s92
    %s93 = sphi 0, %s90
    %s94 = sphi 0, %s93
    %s110 = sphi 0, %s94
    %s116 = sphi 0, %s118
    %s119 = sphi 0, %s116
    %s120 = sphi 0, %s119
    %s136 = sphi 0, %s120
    %s142 = sphi 0, %s144
    %s145 = sphi 0, %s142
    %s146 = sphi 0, %s145
    %s162 = sphi 0, %s146
  $region4: #{piczak_snn_block.1} parent=0 // loop_header_branch
    %15 = sbr.rel (%p13) target = $region8
  $region5: #{piczak_snn_block.1} parent=0 // loop_body
    %s17 = ssub.s32 %s12, 1
    %s18 = ssub.s32 %s12, 2
    %s19 = sadd.s32 %s12, 1
    %s20 = ssub.s32 %s12, %s19
    %p21 = scmp.eq.s32.totalorder %s20, 0
    %s23 = sadd.s32 %s22, 1
    %s24 = scalar_select %p21, %s22, %s23
    %p27 = pneg %p21
    %p28 = scmp.eq.s32.totalorder %s12, 1
    %p29 = por %p27, %p28
    %p30 = scmp.ne.s32.totalorder %s22, %s25
    %p31 = scmp.eq.s32.totalorder %s12, 0
    %p32 = por %p30, %p31
    %p33 = scmp.ne.s32.totalorder %s22, %s25
    %p34 = scmp.eq.s32.totalorder %s17, 1
    %p35 = por %p33, %p34
    %p36 = scmp.ne.s32.totalorder %s25, %s26
    %p37 = scmp.eq.s32.totalorder %s17, 0
    %p38 = por %p36, %p37
    %p39 = scmp.ne.s32.totalorder %s25, %s26
    %p40 = scmp.eq.s32.totalorder %s18, 1
    %p41 = por %p39, %p40
    %p43 = scmp.ne.s32.totalorder %s26, %s42
    %p44 = scmp.eq.s32.totalorder %s18, 0
    %p45 = por %p43, %p44
    %s47 = sadd.s32 %s46, 1
    %p50 = scmp.eq.s32.totalorder %s12, 1
    %p51 = scmp.ne.s32.totalorder %s46, %s48
    %p52 = scmp.eq.s32.totalorder %s12, 0
    %p53 = por %p51, %p52
    %p54 = scmp.ne.s32.totalorder %s46, %s48
    %p55 = scmp.eq.s32.totalorder %s17, 1
    %p56 = por %p54, %p55
    %p57 = scmp.ne.s32.totalorder %s48, %s49
    %p58 = scmp.eq.s32.totalorder %s17, 0
    %p59 = por %p57, %p58
    %p60 = scmp.ne.s32.totalorder %s48, %s49
    %p61 = scmp.eq.s32.totalorder %s18, 1
    %p62 = por %p60, %p61
    %p64 = scmp.ne.s32.totalorder %s49, %s63
    %p65 = scmp.eq.s32.totalorder %s18, 0
    %p66 = por %p64, %p65
    %s68 = sadd.s32 %s67, 1
    %p71 = scmp.eq.s32.totalorder %s12, 1
    %p72 = scmp.ne.s32.totalorder %s67, %s69
    %p73 = scmp.eq.s32.totalorder %s12, 0
    %p74 = por %p72, %p73
    %p75 = scmp.ne.s32.totalorder %s67, %s69
    %p76 = scmp.eq.s32.totalorder %s17, 1
    %p77 = por %p75, %p76
    %p78 = scmp.ne.s32.totalorder %s69, %s70
    %p79 = scmp.eq.s32.totalorder %s17, 0
    %p80 = por %p78, %p79
    %p81 = scmp.ne.s32.totalorder %s69, %s70
    %p82 = scmp.eq.s32.totalorder %s18, 1
    %p83 = por %p81, %p82
    %p85 = scmp.ne.s32.totalorder %s70, %s84
    %p86 = scmp.eq.s32.totalorder %s18, 0
    %p87 = por %p85, %p86
    %s88 = ssub.s32 %s12, %s19
    %p89 = scmp.eq.s32.totalorder %s88, 0
    %s91 = sadd.s32 %s90, 1
    %s92 = scalar_select %p89, %s90, %s91
    %p95 = pneg %p89
    %p96 = scmp.eq.s32.totalorder %s12, 1
    %p97 = por %p95, %p96
    %p98 = scmp.ne.s32.totalorder %s90, %s93
    %p99 = scmp.eq.s32.totalorder %s12, 0
    %p100 = por %p98, %p99
    %p101 = scmp.ne.s32.totalorder %s90, %s93
    %p102 = scmp.eq.s32.totalorder %s17, 1
    %p103 = por %p101, %p102
    %p104 = scmp.ne.s32.totalorder %s93, %s94
    %p105 = scmp.eq.s32.totalorder %s17, 0
    %p106 = por %p104, %p105
    %p107 = scmp.ne.s32.totalorder %s93, %s94
    %p108 = scmp.eq.s32.totalorder %s18, 1
    %p109 = por %p107, %p108
    %p111 = scmp.ne.s32.totalorder %s94, %s110
    %p112 = scmp.eq.s32.totalorder %s18, 0
    %p113 = por %p111, %p112
    %s114 = ssub.s32 %s12, %s19
    %p115 = scmp.eq.s32.totalorder %s114, 0
    %s117 = sadd.s32 %s116, 1
    %s118 = scalar_select %p115, %s116, %s117
    %p121 = pneg %p115
    %p122 = scmp.eq.s32.totalorder %s12, 1
    %p123 = por %p121, %p122
    %p124 = scmp.ne.s32.totalorder %s116, %s119
    %p125 = scmp.eq.s32.totalorder %s12, 0
    %p126 = por %p124, %p125
    %p127 = scmp.ne.s32.totalorder %s116, %s119
    %p128 = scmp.eq.s32.totalorder %s17, 1
    %p129 = por %p127, %p128
    %p130 = scmp.ne.s32.totalorder %s119, %s120
    %p131 = scmp.eq.s32.totalorder %s17, 0
    %p132 = por %p130, %p131
    %p133 = scmp.ne.s32.totalorder %s119, %s120
    %p134 = scmp.eq.s32.totalorder %s18, 1
    %p135 = por %p133, %p134
    %p137 = scmp.ne.s32.totalorder %s120, %s136
    %p138 = scmp.eq.s32.totalorder %s18, 0
    %p139 = por %p137, %p138
    %s140 = ssub.s32 %s12, %s19
    %p141 = scmp.eq.s32.totalorder %s140, 0
    %s143 = sadd.s32 %s142, 1
    %s144 = scalar_select %p141, %s142, %s143
    %p147 = pneg %p141
    %p148 = scmp.eq.s32.totalorder %s12, 1
    %p149 = por %p147, %p148
    %p150 = scmp.ne.s32.totalorder %s142, %s145
    %p151 = scmp.eq.s32.totalorder %s12, 0
    %p152 = por %p150, %p151
    %p153 = scmp.ne.s32.totalorder %s142, %s145
    %p154 = scmp.eq.s32.totalorder %s17, 1
    %p155 = por %p153, %p154
    %p156 = scmp.ne.s32.totalorder %s145, %s146
    %p157 = scmp.eq.s32.totalorder %s17, 0
    %p158 = por %p156, %p157
    %p159 = scmp.ne.s32.totalorder %s145, %s146
    %p160 = scmp.eq.s32.totalorder %s18, 1
    %p161 = por %p159, %p160
    %p163 = scmp.ne.s32.totalorder %s146, %s162
    %p164 = scmp.eq.s32.totalorder %s18, 0
    %p165 = por %p163, %p164
    %p166 = scmp.le.s32.totalorder 1, %s12
    %p167 = scmp.lt.s32.totalorder %s12, 3
    %p168 = pnand %p166, %p167
    %p169 = pneg %p168
    // Predicated region
    $region9: #{piczak_snn_block.1} parent=5 // pred_check
      _
    $region10: #{piczak_snn_block.1} parent=5 // pred_check_branch
      %171 = sbr.rel (%p168) target = $region12
    $region11: #{piczak_snn_block.1} parent=5 // pred_region
      %s172 = ssub.s32 %s12, 1
      // Predicated region
      $region13: #{piczak_snn_block.1} parent=11 // pred_check
        %p173 = pneg %p59
      $region14: #{piczak_snn_block.1} parent=11 // pred_check_branch
        %175 = sbr.rel (%p173) target = $region16
      $region15: #{piczak_snn_block.1} parent=11 // pred_region
        _
      $region16: #{piczak_snn_block.1} parent=11 // pred_fallthru
        _
      // Predicated region
      $region17: #{piczak_snn_block.1} parent=11 // pred_check
        %p176 = pneg %p80
      $region18: #{piczak_snn_block.1} parent=11 // pred_check_branch
        %178 = sbr.rel (%p176) target = $region20
      $region19: #{piczak_snn_block.1} parent=11 // pred_region
        _
      $region20: #{piczak_snn_block.1} parent=11 // pred_fallthru
        _
    $region12: #{piczak_snn_block.1} parent=5 // pred_fallthru
      _
    %p179 = scmp.lt.s32.totalorder %s12, 2
    // Predicated region
    $region21: #{piczak_snn_block.1} parent=5 // pred_check
      %p180 = pneg %p179
    $region22: #{piczak_snn_block.1} parent=5 // pred_check_branch
      %182 = sbr.rel (%p180) target = $region24
    $region23: #{piczak_snn_block.1} parent=5 // pred_region
      // Predicated region
      $region25: #{piczak_snn_block.1} parent=23 // pred_check
        %p183 = pneg %p32
      $region26: #{piczak_snn_block.1} parent=23 // pred_check_branch
        %185 = sbr.rel (%p183) target = $region28
      $region27: #{piczak_snn_block.1} parent=23 // pred_region
        %p186 = scmp.lt.s32.totalorder %s12, 1
        %s187 = scalar_select %p186, %s12, 1
        %s188 = smul.addr %s187, 20
        %s189 = smul.addr %s188, 4
        %s190 = scalar_lea.vmem %s0, %s189
      $region28: #{piczak_snn_block.1} parent=23 // pred_fallthru
        _
      // Predicated region
      $region29: #{piczak_snn_block.1} parent=23 // pred_check
        %p191 = pneg %p100
      $region30: #{piczak_snn_block.1} parent=23 // pred_check_branch
        %193 = sbr.rel (%p191) target = $region32
      $region31: #{piczak_snn_block.1} parent=23 // pred_region
        %p194 = scmp.lt.s32.totalorder %s12, 1
        %s195 = scalar_select %p194, %s12, 1
        %s196 = smul.addr %s195, 8
        %s197 = scalar_lea.vmem %s3, %s196
      $region32: #{piczak_snn_block.1} parent=23 // pred_fallthru
        _
    $region24: #{piczak_snn_block.1} parent=5 // pred_fallthru
      _
    %p198 = scmp.le.s32.totalorder 1, %s12
    %p199 = scmp.lt.s32.totalorder %s12, 3
    %p200 = pnand %p198, %p199
    %p201 = pneg %p200
    // Predicated region
    $region33: #{piczak_snn_block.1} parent=5 // pred_check
      _
    $region34: #{piczak_snn_block.1} parent=5 // pred_check_branch
      %203 = sbr.rel (%p200) target = $region36
    $region35: #{piczak_snn_block.1} parent=5 // pred_region
      %s204 = ssub.s32 %s12, 1
      %p205 = scmp.lt.s32.totalorder %s17, 1
      %s206 = scalar_select %p205, %s17, 1
      %s207 = smul.addr %s206, 20
      %s208 = smul.addr %s207, 4
      %s209 = scalar_lea.vmem %s0, %s208
      %p210 = pneg %p38
      %p211 = pneg %p35
      %p212 = pneg %p59
      %p213 = pneg %p56
      %p214 = pneg %p80
      %p215 = pneg %p77
      %p216 = scmp.lt.s32.totalorder %s17, 1
      %s217 = scalar_select %p216, %s17, 1
      %s218 = smul.addr %s217, 8
      %s219 = scalar_lea.vmem %s3, %s218
      %p220 = pneg %p106
      %p221 = pneg %p103
      %p222 = pneg %p132
      %p223 = pneg %p129
      %p224 = scmp.lt.s32.totalorder %s17, 1
      %s225 = scalar_select %p224, %s17, 1
      %s226 = smul.addr %s225, 8
      %s227 = scalar_lea.vmem %s4, %s226
      %p228 = pneg %p158
      %p229 = pneg %p155
      %p230 = scmp.lt.s32.totalorder %s17, 1
      %s231 = scalar_select %p230, %s17, 1
      %s232 = smul.addr %s231, 8
      %s233 = scalar_lea.vmem %s5, %s232
      %p234 = scmp.lt.s32.totalorder %s17, 1
      %s235 = scalar_select %p234, %s17, 1
      %s236 = smul.addr %s235, 20
      %s237 = smul.addr %s236, 4
      %s238 = scalar_lea.vmem %s0, %s237
      %p239 = scmp.lt.s32.totalorder %s17, 1
      %s240 = scalar_select %p239, %s17, 1
      %s241 = smul.addr %s240, 8
      %s242 = scalar_lea.vmem %s3, %s241
      %p243 = scmp.lt.s32.totalorder %s17, 1
      %s244 = scalar_select %p243, %s17, 1
      %s245 = smul.addr %s244, 8
      %s246 = scalar_lea.vmem %s4, %s245
      %p247 = scmp.lt.s32.totalorder %s17, 1
      %s248 = scalar_select %p247, %s17, 1
      %s249 = smul.addr %s248, 8
      %s250 = scalar_lea.vmem %s5, %s249
      %v252 = vld [vmem:[%s1] sm:$0xf]
      %v253 = vld [vmem:[%s238] sm:$0xf]
      %v254 = vld [vmem:[%s238 + $0x4] sm:$0xf]
      %v255 = vld [vmem:[%s238 + $0x8] sm:$0xf]
      %v256 = vld [vmem:[%s238 + $0xc] sm:$0xf]
      %v257 = vld [vmem:[%s238 + $0x10] sm:$0x3]
      %v263 = vunpack.c.l.b16 %v253
      %v264 = vunpack.c.l.b16 %v254
      %v265 = vunpack.c.l.b16 %v255
      %v266 = vunpack.c.l.b16 %v256
      %v267 = vunpack.c.l.b16 %v257
      %v268 = vpack.c.b16 %v264, %v263
      %v269 = vpack.c.b16 %v266, %v265
      %v270 = vpack.c.b16 %v267, %v267
      %vm273 = vcmask 293888
      %v275 = vsel %vm273, %v252, 0
      %vm277 = vcmask 1041408
      %v279 = vsel %vm277, %v270, 0
      %281 = vmatprep.subr.bf16.mxu0 0
      %282 = vmatpush1.bf16.msra.mxu0 0
      %283 = vmatprep.subr.bf16.mxu0 0
      %284 = vmatpush1.bf16.msra.mxu0 0
      %285 = vmatprep.subr.bf16.mxu0 0
      %286 = vmatpush1.bf16.msra.mxu0 0
      %287 = vmatprep.subr.bf16.mxu0 0
      %288 = vmatpush1.bf16.msra.mxu0 0
      %289 = vmatprep.subr.bf16.mxu0 0
      %290 = vmatpush1.bf16.msra.mxu0 0
      %291 = vmatprep.subr.bf16.mxu0 0
      %292 = vmatpush1.bf16.msra.mxu0 %v279
      %293 = vmatprep.subr.bf16.mxu0 0
      %294 = vmatpush1.bf16.msra.mxu0 %v269
      %295 = vmatprep.subr.bf16.mxu0 0
      %296 = vmatpush1.bf16.msra.mxu0 %v268
      %297 = vmatprep.subr.bf16.mxu0 0
      %298 = vmatpush2.bf16.msra.mxu0 0
      %299 = vmatprep.subr.bf16.mxu0 0
      %300 = vmatpush2.bf16.msra.mxu0 0
      %301 = vmatprep.subr.bf16.mxu0 0
      %302 = vmatpush2.bf16.msra.mxu0 0
      %303 = vmatprep.subr.bf16.mxu0 0
      %304 = vmatpush2.bf16.msra.mxu0 0
      %305 = vmatprep.subr.bf16.mxu0 0
      %306 = vmatpush2.bf16.msra.mxu0 0
      %307 = vmatprep.subr.bf16.mxu0 0
      %308 = vmatpush2.bf16.msra.mxu0 0
      %309 = vmatprep.subr.bf16.mxu0 0
      %310 = vmatpush2.bf16.msra.mxu0 0
      %311 = vmatprep.subr.bf16.mxu0 0
      %312 = vmatpush2.bf16.msra.mxu0 0
      %313 = vmatprep.mubr.bf16.mxu0 0
      %314 = vmatmul.mubr.bf16.gmra.mxu0 %v275
      %v315 = vpop.f32.mrf.mxu0
      %v316 = vadd.f32 0.0, %v315
      %v317 = vpop.f32.mrf.mxu0
      %v318 = vpop.f32.mrf.mxu0
      %v319 = vpop.f32.mrf.mxu0
      %320 = vdwg.mxu0
      %s321 = scalar_lea.vmem %s238, 20
      %v322 = vld [vmem:[%s321] sm:$0xf]
      %v323 = vld [vmem:[%s321 + $0x4] sm:$0xf]
      %v324 = vld [vmem:[%s321 + $0x8] sm:$0xf]
      %v325 = vld [vmem:[%s321 + $0xc] sm:$0xf]
      %v326 = vld [vmem:[%s321 + $0x10] sm:$0x3]
      %v332 = vunpack.c.l.b16 %v322
      %v333 = vunpack.c.l.b16 %v323
      %v334 = vunpack.c.l.b16 %v324
      %v335 = vunpack.c.l.b16 %v325
      %v336 = vunpack.c.l.b16 %v326
      %v337 = vpack.c.b16 %v333, %v332
      %v338 = vpack.c.b16 %v335, %v334
      %v339 = vpack.c.b16 %v336, %v336
      %v343 = vsel %vm277, %v339, 0
      %345 = vmatprep.subr.bf16.mxu0 0
      %346 = vmatpush1.bf16.msra.mxu0 0
      %347 = vmatprep.subr.bf16.mxu0 0
      %348 = vmatpush1.bf16.msra.mxu0 0
      %349 = vmatprep.subr.bf16.mxu0 0
      %350 = vmatpush1.bf16.msra.mxu0 0
      %351 = vmatprep.subr.bf16.mxu0 0
      %352 = vmatpush1.bf16.msra.mxu0 0
      %353 = vmatprep.subr.bf16.mxu0 0
      %354 = vmatpush1.bf16.msra.mxu0 0
      %355 = vmatprep.subr.bf16.mxu0 0
      %356 = vmatpush1.bf16.msra.mxu0 %v343
      %357 = vmatprep.subr.bf16.mxu0 0
      %358 = vmatpush1.bf16.msra.mxu0 %v338
      %359 = vmatprep.subr.bf16.mxu0 0
      %360 = vmatpush1.bf16.msra.mxu0 %v337
      %361 = vmatprep.subr.bf16.mxu0 0
      %362 = vmatpush2.bf16.msra.mxu0 0
      %363 = vmatprep.subr.bf16.mxu0 0
      %364 = vmatpush2.bf16.msra.mxu0 0
      %365 = vmatprep.subr.bf16.mxu0 0
      %366 = vmatpush2.bf16.msra.mxu0 0
      %367 = vmatprep.subr.bf16.mxu0 0
      %368 = vmatpush2.bf16.msra.mxu0 0
      %369 = vmatprep.subr.bf16.mxu0 0
      %370 = vmatpush2.bf16.msra.mxu0 0
      %371 = vmatprep.subr.bf16.mxu0 0
      %372 = vmatpush2.bf16.msra.mxu0 0
      %373 = vmatprep.subr.bf16.mxu0 0
      %374 = vmatpush2.bf16.msra.mxu0 0
      %375 = vmatprep.subr.bf16.mxu0 0
      %376 = vmatpush2.bf16.msra.mxu0 0
      %377 = vmatprep.mubr.bf16.mxu0 0
      %378 = vmatmul.mubr.bf16.gmra.mxu0 %v275
      %v379 = vpop.f32.mrf.mxu0
      %v380 = vadd.f32 0.0, %v379
      %v381 = vpop.f32.mrf.mxu0
      %v382 = vpop.f32.mrf.mxu0
      %v383 = vpop.f32.mrf.mxu0
      %384 = vdwg.mxu0
      %v385 = vmax.f32 %v316, %v380
      %s386 = scalar_lea.vmem %s238, 40
      %v387 = vld [vmem:[%s386] sm:$0xf]
      %v388 = vld [vmem:[%s386 + $0x4] sm:$0xf]
      %v389 = vld [vmem:[%s386 + $0x8] sm:$0xf]
      %v390 = vld [vmem:[%s386 + $0xc] sm:$0xf]
      %v391 = vld [vmem:[%s386 + $0x10] sm:$0x3]
      %v397 = vunpack.c.l.b16 %v387
      %v398 = vunpack.c.l.b16 %v388
      %v399 = vunpack.c.l.b16 %v389
      %v400 = vunpack.c.l.b16 %v390
      %v401 = vunpack.c.l.b16 %v391
      %v402 = vpack.c.b16 %v398, %v397
      %v403 = vpack.c.b16 %v400, %v399
      %v404 = vpack.c.b16 %v401, %v401
      %v408 = vsel %vm277, %v404, 0
      %410 = vmatprep.subr.bf16.mxu0 0
      %411 = vmatpush1.bf16.msra.mxu0 0
      %412 = vmatprep.subr.bf16.mxu0 0
      %413 = vmatpush1.bf16.msra.mxu0 0
      %414 = vmatprep.subr.bf16.mxu0 0
      %415 = vmatpush1.bf16.msra.mxu0 0
      %416 = vmatprep.subr.bf16.mxu0 0
      %417 = vmatpush1.bf16.msra.mxu0 0
      %418 = vmatprep.subr.bf16.mxu0 0
      %419 = vmatpush1.bf16.msra.mxu0 0
      %420 = vmatprep.subr.bf16.mxu0 0
      %421 = vmatpush1.bf16.msra.mxu0 %v408
      %422 = vmatprep.subr.bf16.mxu0 0
      %423 = vmatpush1.bf16.msra.mxu0 %v403
      %424 = vmatprep.subr.bf16.mxu0 0
      %425 = vmatpush1.bf16.msra.mxu0 %v402
      %426 = vmatprep.subr.bf16.mxu0 0
      %427 = vmatpush2.bf16.msra.mxu0 0
      %428 = vmatprep.subr.bf16.mxu0 0
      %429 = vmatpush2.bf16.msra.mxu0 0
      %430 = vmatprep.subr.bf16.mxu0 0
      %431 = vmatpush2.bf16.msra.mxu0 0
      %432 = vmatprep.subr.bf16.mxu0 0
      %433 = vmatpush2.bf16.msra.mxu0 0
      %434 = vmatprep.subr.bf16.mxu0 0
      %435 = vmatpush2.bf16.msra.mxu0 0
      %436 = vmatprep.subr.bf16.mxu0 0
      %437 = vmatpush2.bf16.msra.mxu0 0
      %438 = vmatprep.subr.bf16.mxu0 0
      %439 = vmatpush2.bf16.msra.mxu0 0
      %440 = vmatprep.subr.bf16.mxu0 0
      %441 = vmatpush2.bf16.msra.mxu0 0
      %442 = vmatprep.mubr.bf16.mxu0 0
      %443 = vmatmul.mubr.bf16.gmra.mxu0 %v275
      %v444 = vpop.f32.mrf.mxu0
      %v445 = vadd.f32 0.0, %v444
      %v446 = vpop.f32.mrf.mxu0
      %v447 = vpop.f32.mrf.mxu0
      %v448 = vpop.f32.mrf.mxu0
      %449 = vdwg.mxu0
      %v450 = vmax.f32 %v385, %v445
      %s451 = scalar_lea.vmem %s238, 60
      %v452 = vld [vmem:[%s451] sm:$0xf]
      %v453 = vld [vmem:[%s451 + $0x4] sm:$0xf]
      %v454 = vld [vmem:[%s451 + $0x8] sm:$0xf]
      %v455 = vld [vmem:[%s451 + $0xc] sm:$0xf]
      %v456 = vld [vmem:[%s451 + $0x10] sm:$0x3]
      %v462 = vunpack.c.l.b16 %v452
      %v463 = vunpack.c.l.b16 %v453
      %v464 = vunpack.c.l.b16 %v454
      %v465 = vunpack.c.l.b16 %v455
      %v466 = vunpack.c.l.b16 %v456
      %v467 = vpack.c.b16 %v463, %v462
      %v468 = vpack.c.b16 %v465, %v464
      %v469 = vpack.c.b16 %v466, %v466
      %v473 = vsel %vm277, %v469, 0
      %475 = vmatprep.subr.bf16.mxu0 0
      %476 = vmatpush1.bf16.msra.mxu0 0
      %477 = vmatprep.subr.bf16.mxu0 0
      %478 = vmatpush1.bf16.msra.mxu0 0
      %479 = vmatprep.subr.bf16.mxu0 0
      %480 = vmatpush1.bf16.msra.mxu0 0
      %481 = vmatprep.subr.bf16.mxu0 0
      %482 = vmatpush1.bf16.msra.mxu0 0
      %483 = vmatprep.subr.bf16.mxu0 0
      %484 = vmatpush1.bf16.msra.mxu0 0
      %485 = vmatprep.subr.bf16.mxu0 0
      %486 = vmatpush1.bf16.msra.mxu0 %v473
      %487 = vmatprep.subr.bf16.mxu0 0
      %488 = vmatpush1.bf16.msra.mxu0 %v468
      %489 = vmatprep.subr.bf16.mxu0 0
      %490 = vmatpush1.bf16.msra.mxu0 %v467
      %491 = vmatprep.subr.bf16.mxu0 0
      %492 = vmatpush2.bf16.msra.mxu0 0
      %493 = vmatprep.subr.bf16.mxu0 0
      %494 = vmatpush2.bf16.msra.mxu0 0
      %495 = vmatprep.subr.bf16.mxu0 0
      %496 = vmatpush2.bf16.msra.mxu0 0
      %497 = vmatprep.subr.bf16.mxu0 0
      %498 = vmatpush2.bf16.msra.mxu0 0
      %499 = vmatprep.subr.bf16.mxu0 0
      %500 = vmatpush2.bf16.msra.mxu0 0
      %501 = vmatprep.subr.bf16.mxu0 0
      %502 = vmatpush2.bf16.msra.mxu0 0
      %503 = vmatprep.subr.bf16.mxu0 0
      %504 = vmatpush2.bf16.msra.mxu0 0
      %505 = vmatprep.subr.bf16.mxu0 0
      %506 = vmatpush2.bf16.msra.mxu0 0
      %507 = vmatprep.mubr.bf16.mxu0 0
      %508 = vmatmul.mubr.bf16.gmra.mxu0 %v275
      %v509 = vpop.f32.mrf.mxu0
      %v510 = vadd.f32 0.0, %v509
      %v511 = vpop.f32.mrf.mxu0
      %v512 = vpop.f32.mrf.mxu0
      %v513 = vpop.f32.mrf.mxu0
      %514 = vdwg.mxu0
      %v515 = vmax.f32 %v450, %v510
      %v516 = vld [vmem:[%s2] sm:$0xff]
      %518 = vset.pattern.permute.xlu0 0
      %519 = vperm.xlu0 %518, %v516
      %v520 = vpop.permute.xlu0 %519
      %v522 = vadd.f32 %v515, %v520
      %v523 = vld [vmem:[%s242] sm:$0xff]
      %vm524 = vcmp.gt.f32.partialorder %v523, 1.0
      %v525 = vsel %vm524, 1, 0
      %v526 = vcvt.s32.f32 %v525
      %v527 = vmul.f32 %v523, 0.9
      %v528 = vadd.f32 %v527, %v522
      %v529 = vsub.f32 %v528, %v526
      %vm530 = vcmp.gt.f32.partialorder %v529, 1.0
      %v531 = vsel %vm530, 1, 0
      %v532 = vcvt.s32.f32 %v531
      %vm533 = vcmask 400384
      %534 = vst.msk [vmem:[%s246] sm:$0xff] %vm533, %v532
      %535 = vst.msk [vmem:[%s250] sm:$0xff] %vm533, %v529
      %p536 = scmp.lt.s32.totalorder %s17, 1
      %s537 = scalar_select %p536, %s17, 1
      %s538 = smul.addr %s537, 8
      %s539 = scalar_lea.vmem %s4, %s538
      %p540 = scmp.lt.s32.totalorder %s17, 1
      %s541 = scalar_select %p540, %s17, 1
      %s542 = smul.addr %s541, 8
      %s543 = scalar_lea.vmem %s5, %s542
      // Predicated region
      $region37: #{piczak_snn_block.1} parent=35 // pred_check
        %p544 = pneg %p129
      $region38: #{piczak_snn_block.1} parent=35 // pred_check_branch
        %546 = sbr.rel (%p544) target = $region40
      $region39: #{piczak_snn_block.1} parent=35 // pred_region
        _
      $region40: #{piczak_snn_block.1} parent=35 // pred_fallthru
        _
      // Predicated region
      $region41: #{piczak_snn_block.1} parent=35 // pred_check
        %p547 = pneg %p155
      $region42: #{piczak_snn_block.1} parent=35 // pred_check_branch
        %549 = sbr.rel (%p547) target = $region44
      $region43: #{piczak_snn_block.1} parent=35 // pred_region
        _
      $region44: #{piczak_snn_block.1} parent=35 // pred_fallthru
        _
    $region36: #{piczak_snn_block.1} parent=5 // pred_fallthru
      _
    %p550 = scmp.le.s32.totalorder 2, %s12
    // Predicated region
    $region45: #{piczak_snn_block.1} parent=5 // pred_check
      %p551 = pneg %p550
    $region46: #{piczak_snn_block.1} parent=5 // pred_check_branch
      %553 = sbr.rel (%p551) target = $region48
    $region47: #{piczak_snn_block.1} parent=5 // pred_region
      %s554 = ssub.s32 %s12, 2
      // Predicated region
      $region49: #{piczak_snn_block.1} parent=47 // pred_check
        %p555 = pneg %p135
      $region50: #{piczak_snn_block.1} parent=47 // pred_check_branch
        %557 = sbr.rel (%p555) target = $region52
      $region51: #{piczak_snn_block.1} parent=47 // pred_region
        %p558 = scmp.lt.s32.totalorder %s18, 1
        %s559 = scalar_select %p558, %s18, 1
        %s560 = smul.addr %s559, 8
        %s561 = scalar_lea.vmem %s4, %s560
      $region52: #{piczak_snn_block.1} parent=47 // pred_fallthru
        _
      // Predicated region
      $region53: #{piczak_snn_block.1} parent=47 // pred_check
        %p562 = pneg %p161
      $region54: #{piczak_snn_block.1} parent=47 // pred_check_branch
        %564 = sbr.rel (%p562) target = $region56
      $region55: #{piczak_snn_block.1} parent=47 // pred_region
        %p565 = scmp.lt.s32.totalorder %s18, 1
        %s566 = scalar_select %p565, %s18, 1
        %s567 = smul.addr %s566, 8
        %s568 = scalar_lea.vmem %s5, %s567
      $region56: #{piczak_snn_block.1} parent=47 // pred_fallthru
        _
    $region48: #{piczak_snn_block.1} parent=5 // pred_fallthru
      _
  $region6: #{piczak_snn_block.1} parent=0 // loop_footer
    %s16 = sadd.s32 1, %s12
  $region7: #{piczak_snn_block.1} parent=0 // loop_footer_branch
    %11 = sbr.rel target = $region3
  $region8: #{piczak_snn_block.1} parent=0 // loop_exit
    _

</llo_original>
